<compile_context>
chip_gen: v6e
topology: v6e:2x2x1
jax: 0.10.0
libtpu: 0.0.40
codegen_flags: <defaults>
</compile_context>

<pallas_src>
import jax
import jax.numpy as jnp
from jax import lax
from jax.experimental import pallas as pl
from jax.experimental.pallas import tpu as pltpu


def _chunk_sizes(c, s):
    """torch.chunk(chunks=s, dim=1) sizes; must yield exactly s chunks."""
    base = -(-c // s)
    sizes = []
    rem = c
    for _ in range(s):
        take = min(base, rem)
        sizes.append(take)
        rem -= take
    assert rem == 0 and all(sz > 0 for sz in sizes), "in_planes too small for s"
    return sizes


def _make_hsblock_kernel(s, w, w1, w2, W, L, Bt, has_carry):
    BtL = Bt * L

    def kernel(*refs):
        if has_carry:
            colx_ref, wblk_ref, wy_ref, bias_ref, o_ref = refs
        else:
            colx_ref, wblk_ref, bias_ref, o_ref = refs

        # One fused MXU call computes every stage's chunk-part convolution
        # (block-diagonal weights x im2col activations), K = 3*sum(ci).
        pre = jnp.dot(wblk_ref[...], colx_ref[...],
                      preferred_element_type=jnp.float32)       # ((s-1)*w, BtL)
        pre = pre + bias_ref[...]                                # folded BN bias

        outs = []
        y2 = None
        for i in range(1, s):
            stage = pre[(i - 1) * w:i * w]                       # (w, BtL)
            if i >= 2 and has_carry:
                # Carry conv: build the 3 H-shifted taps of y2 and fuse them
                # into a single (w, 3*w2) x (3*w2, BtL) matmul.
                if Bt == 1:
                    zW = jnp.zeros((w2, W), jnp.float32)
                    down = jnp.concatenate([zW, y2[:, :L - W]], axis=-1)
                    up = jnp.concatenate([y2[:, W:], zW], axis=-1)
                    ccol = jnp.concatenate([down, y2, up], axis=0)
                else:
                    y2r = y2.reshape(w2, Bt, L)
                    zW = jnp.zeros((w2, Bt, W), jnp.float32)
                    down = jnp.concatenate([zW, y2r[:, :, :L - W]], axis=-1)
                    up = jnp.concatenate([y2r[:, :, W:], zW], axis=-1)
                    ccol = jnp.concatenate(
                        [down.reshape(w2, BtL), y2, up.reshape(w2, BtL)],
                        axis=0)
                stage = stage + jnp.dot(
                    wy_ref[i - 2], ccol.astype(wy_ref.dtype),
                    preferred_element_type=jnp.float32)
            y = jnp.maximum(stage, 0.0)
            if i == s - 1:
                outs.append(y)
            else:
                outs.append(y[:w1])
                if has_carry:
                    y2 = y[w1:w1 + w2]

        # Single dense, lane-aligned store of the whole conv-output tile.
        o_ref[...] = jnp.concatenate(outs, axis=0).astype(o_ref.dtype)

    return kernel


def hsblock_forward(x, stage_params, s, w, eps=1e-5, block_batch=None,
                    operand_dtype=jnp.float32):
    """x: (B, Cin, H, W) NCHW float32.

    stage_params: list of length s-1; each entry is
      (conv_w (w, cin_i, 3, 1), conv_b (w,), gamma (w,), beta (w,),
       running_mean (w,), running_var (w,))
    with cin_1 = chunk_size and cin_i = chunk_size_i + w//2 for i >= 2.
    operand_dtype: jnp.bfloat16 is a good choice on v6e/v7x; keep f32 on v5e
    or when bit-level closeness to the f32 reference is required.
    """
    B, Cin, H, Wd = x.shape
    sizes = _chunk_sizes(Cin, s)
    c0 = sizes[0]
    L = H * Wd
    w1 = (w + 1) // 2
    w2 = w - w1
    has_carry = (s > 2) and (w2 > 0)
    Wout_all = (s - 1) * w
    K_all = 3 * sum(sizes[1:])
    Cout_k = (s - 2) * w1 + w            # conv-output channels from the kernel

    # Batch images per grid step: keep >= 2 grid steps when B >= 2 (both v7x
    # TensorCores get work); bigger B gets bigger lane-folded blocks.
    if block_batch is None:
        block_batch = max(1, min(8, B // 2)) if B >= 2 else 1
    while B % block_batch != 0:
        block_batch -= 1
    Bt = block_batch

    # ---- im2col activations for chunks 1..s-1 (tap-major rows, batch folded
    # into the lane axis) -> one lane-dense (K_all, B*L) input ---------------
    cols = []
    off = c0
    for i in range(1, s):
        ci = sizes[i]
        ck = x[:, off:off + ci]
        off += ci
        ckp = jnp.pad(ck, ((0, 0), (0, 0), (1, 1), (0, 0)))     # H-pad once
        taps = jnp.stack([ckp[:, :, kh:kh + H, :] for kh in range(3)], axis=1)
        cols.append(taps.reshape(B, 3 * ci, L))                  # (B, 3*ci, L)
    colx = jnp.concatenate(cols, axis=1)                         # (B, K_all, L)
    colx = jnp.transpose(colx, (1, 0, 2)).reshape(K_all, B * L)
    colx = colx.astype(operand_dtype)

    # ---- fold eval-mode BN + conv bias; pack weights ------------------------
    wblk = jnp.zeros((Wout_all, K_all), jnp.float32)   # block-diag chunk weights
    wys, biases = [], []
    col_off = 0
    for i in range(1, s):
        cw, cb, g, beta, mu, var = stage_params[i - 1]
        scale = g / jnp.sqrt(var + eps)                          # (w,)
        w_eff = cw[..., 0] * scale[:, None, None]                # (w, cin_i, 3)
        b_eff = beta + scale * (cb - mu)                         # (w,)
        ci = sizes[i]
        wc = jnp.transpose(w_eff[:, :ci, :], (0, 2, 1)).reshape(w, 3 * ci)
        wblk = wblk.at[(i - 1) * w:i * w, col_off:col_off + 3 * ci].set(wc)
        col_off += 3 * ci
        if i >= 2 and has_carry:
            wy = jnp.transpose(w_eff[:, ci:, :], (0, 2, 1)).reshape(w, 3 * w2)
            wys.append(wy)
        biases.append(b_eff)
    wblk = wblk.astype(operand_dtype)
    bias_all = jnp.concatenate(biases).reshape(Wout_all, 1).astype(jnp.float32)

    inputs = [colx, wblk]
    in_specs = [
        pl.BlockSpec((K_all, Bt * L), lambda g: (0, g)),
        pl.BlockSpec((Wout_all, K_all), lambda g: (0, 0)),
    ]
    if has_carry:
        wy_all = jnp.stack(wys).astype(operand_dtype)            # (s-2, w, 3*w2)
        inputs.append(wy_all)
        in_specs.append(pl.BlockSpec((s - 2, w, 3 * w2), lambda g: (0, 0, 0)))
    inputs.append(bias_all)
    in_specs.append(pl.BlockSpec((Wout_all, 1), lambda g: (0, 0)))

    kernel = _make_hsblock_kernel(s, w, w1, w2, Wd, L, Bt, has_carry)

    out_k = pl.pallas_call(
        kernel,
        out_shape=jax.ShapeDtypeStruct((Cout_k, B * L), x.dtype),
        grid=(B // Bt,),
        in_specs=in_specs,
        out_specs=pl.BlockSpec((Cout_k, Bt * L), lambda g: (0, g)),
        compiler_params=pltpu.CompilerParams(
            dimension_semantics=("parallel",)),
    )(*inputs)

    out_conv = out_k.reshape(Cout_k, B, H, Wd).transpose(1, 0, 2, 3)
    # chunk 0 is a pure pass-through: concatenate it in the wrapper.
    return jnp.concatenate([x[:, :c0], out_conv.astype(x.dtype)], axis=1)


def reference_jax(x, stage_params, s, w, eps=1e-5):
    """Pure-JAX reference mirroring the PyTorch forward (eval-mode BN)."""
    B, Cin, H, Wd = x.shape
    sizes = _chunk_sizes(Cin, s)
    xs, off = [], 0
    for ci in sizes:
        xs.append(x[:, off:off + ci])
        off += ci
    x0 = xs[0]
    for i in range(1, s):
        cw, cb, g, beta, mu, var = stage_params[i - 1]
        y = lax.conv_general_dilated(
            xs[i].astype(jnp.float32), cw.astype(jnp.float32),
            window_strides=(1, 1), padding=((1, 1), (0, 0)),
            dimension_numbers=('NCHW', 'OIHW', 'NCHW'))
        y = y + cb[None, :, None, None]
        y = (y - mu[None, :, None, None]) * jax.lax.rsqrt(
            var + eps)[None, :, None, None]
        y = y * g[None, :, None, None] + beta[None, :, None, None]
        y = jnp.maximum(y, 0.0)
        if i == s - 1:
            x0 = jnp.concatenate([x0, y.astype(x.dtype)], axis=1)
        else:
            c1 = (y.shape[1] + 1) // 2
            y1, y2 = y[:, :c1], y[:, c1:]
            x0 = jnp.concatenate([x0, y1.astype(x.dtype)], axis=1)
            xs[i + 1] = jnp.concatenate([xs[i + 1], y2.astype(x.dtype)], axis=1)
    return x0


if __name__ == "__main__":
    B, IN_PLANES, H, W = 2, 8, 16, 16
    S, WCH = 4, 8                     # HSBlock(in_planes=8, s=4, w=8)

    key = jax.random.PRNGKey(0)
    kx, *ks = jax.random.split(key, 1 + 6 * (S - 1))

    x = jax.random.normal(kx, (B, IN_PLANES, H, W), dtype=jnp.float32)

    sizes = _chunk_sizes(IN_PLANES, S)
    w2 = WCH - (WCH + 1) // 2

    stage_params = []
    kit = iter(ks)
    for i in range(1, S):
        cin = sizes[i] + (0 if i == 1 else w2)
        kw_, kb_, kg_, kbe_, kmu_, kv_ = (next(kit) for _ in range(6))
        cw = jax.random.normal(kw_, (WCH, cin, 3, 1), jnp.float32) * (
            (cin * 3) ** -0.5)
        cb = 0.1 * jax.random.normal(kb_, (WCH,), jnp.float32)
        g = 1.0 + 0.1 * jax.random.normal(kg_, (WCH,), jnp.float32)
        beta = 0.1 * jax.random.normal(kbe_, (WCH,), jnp.float32)
        mu = 0.1 * jax.random.normal(kmu_, (WCH,), jnp.float32)
        var = jnp.abs(jax.random.normal(kv_, (WCH,), jnp.float32)) + 0.5
        stage_params.append((cw, cb, g, beta, mu, var))

    out = hsblock_forward(x, stage_params, S, WCH)
    out = jax.block_until_ready(out)

    ref = reference_jax(x, stage_params, S, WCH)
    assert out.shape == ref.shape and out.dtype == x.dtype
    assert jnp.allclose(out, ref, rtol=1e-4, atol=1e-4), float(
        jnp.max(jnp.abs(out - ref)))

    print("KERNEL_OK")
</pallas_src>

<mosaic_0001>
module attributes {stable_mosaic.version = 11 : i64} {
  func.func @kernel(%arg0: i32, %arg1: memref<18x256xf32, #tpu.memory_space<vmem>>, %arg2: memref<24x18xf32, #tpu.memory_space<vmem>>, %arg3: memref<2x8x12xf32, #tpu.memory_space<vmem>>, %arg4: memref<24x1xf32, #tpu.memory_space<vmem>>, %arg5: memref<16x256xf32, #tpu.memory_space<vmem>>) attributes {dimension_semantics = [#tpu.dimension_semantics<parallel>], iteration_bounds = array<i64: 2>, scalar_prefetch = 0 : i64, scratch_operands = 0 : i64, tpu.core_type = #tpu.core_type<tc>, window_params = [{transform_indices = @transform_0, window_bounds = array<i64: 18, 256>}, {pipeline_mode = #tpu.pipeline_mode<synchronous>, transform_indices = @transform_1, window_bounds = array<i64: 24, 18>}, {pipeline_mode = #tpu.pipeline_mode<synchronous>, transform_indices = @transform_2, window_bounds = array<i64: 2, 8, 12>}, {pipeline_mode = #tpu.pipeline_mode<synchronous>, transform_indices = @transform_3, window_bounds = array<i64: 24, 1>}, {transform_indices = @transform_4, window_bounds = array<i64: 16, 256>}]} {
    %c0 = arith.constant 0 : index
    %c0_0 = arith.constant 0 : index
    %0 = vector.load %arg2[%c0, %c0_0] : memref<24x18xf32, #tpu.memory_space<vmem>>, vector<24x18xf32>
    %c0_1 = arith.constant 0 : index
    %c0_2 = arith.constant 0 : index
    %1 = vector.load %arg1[%c0_1, %c0_2] : memref<18x256xf32, #tpu.memory_space<vmem>>, vector<18x256xf32>
    %cst = arith.constant dense<0.000000e+00> : vector<24x256xf32>
    %2 = tpu.matmul %0, %1, %cst {dimension_numbers = #tpu.dot_dimension_numbers<[1], [0], [0], [1], [0, 0, 1, 1], [], []>} : vector<24x18xf32>, vector<18x256xf32>, vector<24x256xf32> -> vector<24x256xf32>
    %c0_3 = arith.constant 0 : index
    %c0_4 = arith.constant 0 : index
    %3 = vector.load %arg4[%c0_3, %c0_4] : memref<24x1xf32, #tpu.memory_space<vmem>>, vector<24x1xf32>
    %4 = vector.broadcast %3 : vector<24x1xf32> to vector<24x256xf32>
    %5 = arith.addf %2, %4 : vector<24x256xf32>
    %6 = vector.extract_strided_slice %5 {offsets = [0, 0], sizes = [8, 256], strides = [1, 1]} : vector<24x256xf32> to vector<8x256xf32>
    %cst_5 = arith.constant 0.000000e+00 : f32
    %7 = vector.broadcast %cst_5 : f32 to vector<8x256xf32>
    %8 = arith.maximumf %6, %7 : vector<8x256xf32>
    %9 = vector.extract_strided_slice %8 {offsets = [0, 0], sizes = [4, 256], strides = [1, 1]} : vector<8x256xf32> to vector<4x256xf32>
    %10 = vector.extract_strided_slice %8 {offsets = [4, 0], sizes = [4, 256], strides = [1, 1]} : vector<8x256xf32> to vector<4x256xf32>
    %11 = vector.extract_strided_slice %5 {offsets = [8, 0], sizes = [8, 256], strides = [1, 1]} : vector<24x256xf32> to vector<8x256xf32>
    %cst_6 = arith.constant 0.000000e+00 : f32
    %12 = vector.broadcast %cst_6 : f32 to vector<4x16xf32>
    %13 = vector.extract_strided_slice %10 {offsets = [0, 0], sizes = [4, 240], strides = [1, 1]} : vector<4x256xf32> to vector<4x240xf32>
    %14 = tpu.concatenate %12, %13 in 1 : vector<4x16xf32>, vector<4x240xf32> -> vector<4x256xf32>
    %15 = vector.extract_strided_slice %10 {offsets = [0, 16], sizes = [4, 240], strides = [1, 1]} : vector<4x256xf32> to vector<4x240xf32>
    %16 = tpu.concatenate %15, %12 in 1 : vector<4x240xf32>, vector<4x16xf32> -> vector<4x256xf32>
    %17 = tpu.concatenate %14, %10, %16 in 0 : vector<4x256xf32>, vector<4x256xf32>, vector<4x256xf32> -> vector<12x256xf32>
    %c0_7 = arith.constant 0 : index
    %c0_8 = arith.constant 0 : index
    %c0_9 = arith.constant 0 : index
    %18 = vector.load %arg3[%c0_7, %c0_8, %c0_9] : memref<2x8x12xf32, #tpu.memory_space<vmem>>, vector<1x8x12xf32>
    %19 = vector.shape_cast %18 : vector<1x8x12xf32> to vector<8x12xf32>
    %cst_10 = arith.constant dense<0.000000e+00> : vector<8x256xf32>
    %20 = tpu.matmul %19, %17, %cst_10 {dimension_numbers = #tpu.dot_dimension_numbers<[1], [0], [0], [1], [0, 0, 1, 1], [], []>} : vector<8x12xf32>, vector<12x256xf32>, vector<8x256xf32> -> vector<8x256xf32>
    %21 = arith.addf %11, %20 : vector<8x256xf32>
    %cst_11 = arith.constant 0.000000e+00 : f32
    %22 = vector.broadcast %cst_11 : f32 to vector<8x256xf32>
    %23 = arith.maximumf %21, %22 : vector<8x256xf32>
    %24 = vector.extract_strided_slice %23 {offsets = [0, 0], sizes = [4, 256], strides = [1, 1]} : vector<8x256xf32> to vector<4x256xf32>
    %25 = vector.extract_strided_slice %23 {offsets = [4, 0], sizes = [4, 256], strides = [1, 1]} : vector<8x256xf32> to vector<4x256xf32>
    %26 = vector.extract_strided_slice %5 {offsets = [16, 0], sizes = [8, 256], strides = [1, 1]} : vector<24x256xf32> to vector<8x256xf32>
    %cst_12 = arith.constant 0.000000e+00 : f32
    %27 = vector.broadcast %cst_12 : f32 to vector<4x16xf32>
    %28 = vector.extract_strided_slice %25 {offsets = [0, 0], sizes = [4, 240], strides = [1, 1]} : vector<4x256xf32> to vector<4x240xf32>
    %29 = tpu.concatenate %27, %28 in 1 : vector<4x16xf32>, vector<4x240xf32> -> vector<4x256xf32>
    %30 = vector.extract_strided_slice %25 {offsets = [0, 16], sizes = [4, 240], strides = [1, 1]} : vector<4x256xf32> to vector<4x240xf32>
    %31 = tpu.concatenate %30, %27 in 1 : vector<4x240xf32>, vector<4x16xf32> -> vector<4x256xf32>
    %32 = tpu.concatenate %29, %25, %31 in 0 : vector<4x256xf32>, vector<4x256xf32>, vector<4x256xf32> -> vector<12x256xf32>
    %c1 = arith.constant 1 : index
    %c0_13 = arith.constant 0 : index
    %c0_14 = arith.constant 0 : index
    %33 = vector.load %arg3[%c1, %c0_13, %c0_14] : memref<2x8x12xf32, #tpu.memory_space<vmem>>, vector<1x8x12xf32>
    %34 = vector.shape_cast %33 : vector<1x8x12xf32> to vector<8x12xf32>
    %cst_15 = arith.constant dense<0.000000e+00> : vector<8x256xf32>
    %35 = tpu.matmul %34, %32, %cst_15 {dimension_numbers = #tpu.dot_dimension_numbers<[1], [0], [0], [1], [0, 0, 1, 1], [], []>} : vector<8x12xf32>, vector<12x256xf32>, vector<8x256xf32> -> vector<8x256xf32>
    %36 = arith.addf %26, %35 : vector<8x256xf32>
    %cst_16 = arith.constant 0.000000e+00 : f32
    %37 = vector.broadcast %cst_16 : f32 to vector<8x256xf32>
    %38 = arith.maximumf %36, %37 : vector<8x256xf32>
    %39 = tpu.concatenate %9, %24, %38 in 0 : vector<4x256xf32>, vector<4x256xf32>, vector<8x256xf32> -> vector<16x256xf32>
    %c0_17 = arith.constant 0 : index
    %c0_18 = arith.constant 0 : index
    %40 = vector.load %arg5[%c0_17, %c0_18] : memref<16x256xf32, #tpu.memory_space<vmem>>, vector<16x256xf32>
    tpu.vector_store %arg5[%c0_17, %c0_18], %39 {strides = array<i32>} : memref<16x256xf32, #tpu.memory_space<vmem>>, vector<16x256xf32>,
    return
  }
  func.func @transform_0(%arg0: i32) -> (i32, i32) {
    %c0_i32 = arith.constant 0 : i32
    %c0_i32_0 = arith.constant 0 : i32
    return %c0_i32, %arg0 : i32, i32
  }
  func.func @transform_1(%arg0: i32) -> (i32, i32) {
    %c0_i32 = arith.constant 0 : i32
    %c0_i32_0 = arith.constant 0 : i32
    %c0_i32_1 = arith.constant 0 : i32
    return %c0_i32, %c0_i32_0 : i32, i32
  }
  func.func @transform_2(%arg0: i32) -> (i32, i32, i32) {
    %c0_i32 = arith.constant 0 : i32
    %c0_i32_0 = arith.constant 0 : i32
    %c0_i32_1 = arith.constant 0 : i32
    %c0_i32_2 = arith.constant 0 : i32
    return %c0_i32, %c0_i32_0, %c0_i32_1 : i32, i32, i32
  }
  func.func @transform_3(%arg0: i32) -> (i32, i32) {
    %c0_i32 = arith.constant 0 : i32
    %c0_i32_0 = arith.constant 0 : i32
    %c0_i32_1 = arith.constant 0 : i32
    return %c0_i32, %c0_i32_0 : i32, i32
  }
  func.func @transform_4(%arg0: i32) -> (i32, i32) {
    %c0_i32 = arith.constant 0 : i32
    %c0_i32_0 = arith.constant 0 : i32
    return %c0_i32, %arg0 : i32, i32
  }
}

</mosaic_0001>

<llo_original>
// kernel: tpu_custom_call.1
$region0: #{tpu_custom_call.1}
  #allocation0 [shape = 'u32[]', space=smem, size = 0x4, offset = 0x4, fixed_abs, tag = 'smem constant byte address 0x4 - core index']
  #allocation1 [shape = 'u32[144,128]{1,0:T(1,128)}', space=vmem, size = 0x12000, scoped, tag = 'internal scratch']
  %s0 = inlined_call_operand.hbm [shape: f32[18,512], index: 0, kind: input, shape index: {}]
  %s1 = inlined_call_operand.vmem [shape: f32[24,18], index: 1, kind: input, shape index: {}]
  %s2 = inlined_call_operand.hbm [shape: f32[2,8,12], index: 2, kind: input, shape index: {}]
  %s3 = inlined_call_operand.vmem [shape: f32[24,1], index: 3, kind: input, shape index: {}]
  %s4 = inlined_call_operand.hbm [shape: f32[16,512], index: 4, kind: output, shape index: {}]
  %s5 = sld [smem:[#allocation0]]
  $region57: #{tpu_custom_call.1} parent=0
    _
  %s7 = ssub.s32 1, %s5
  %s8 = scalar_select 0, %s7, %s5
  $region1: #{tpu_custom_call.1} parent=0
    #allocation2 [shape = 'u8[49152]{0}', space=vmem, size = 0xc000, scoped, tag = 'input window, operand 0']
    #allocation3 [shape = 's32[2]{0}', space=sflag, size = 0x8, scoped, tag = 'scoped memory for tpu_custom_call.1']
    #allocation4 [shape = 's32[2]{0}', space=sflag, size = 0x8, scoped, tag = 'scoped memory for tpu_custom_call.1']
    #allocation5 [shape = 'u8[8192]{0}', space=vmem, size = 0x2000, scoped, tag = 'input window, operand 2, single buffered']
    #allocation6 [shape = 's32[1]{0}', space=sflag, size = 0x4, scoped, tag = 'scoped memory for tpu_custom_call.1']
    #allocation7 [shape = 'u8[32768]{0}', space=vmem, size = 0x8000, scoped, tag = 'output window, operand 0']
    %9 = vsyncpa [#allocation3], 0
    %s10 = scalar_lea.sflag [#allocation3], 1
    %11 = vsyncpa %s10, 0
    %12 = vsyncpa [#allocation6], 0
    %13 = vsyncpa [#allocation4], 0
    %s14 = scalar_lea.sflag [#allocation4], 1
    %15 = vsyncpa %s14, 0
    loop: start=0, step=1, limit=4
    $region2: #{tpu_custom_call.1} parent=1 // loop_pre_header
      _
    $region3: #{tpu_custom_call.1} parent=1 // loop_header
      %s17 = sphi 0, %s21
      %p18 = scmp.ge.s32.totalorder %s17, 4
      %s27 = sphi 0, %s29
      %s30 = sphi 0, %s27
      %s31 = sphi 0, %s30
      %s47 = sphi 0, %s31
      %s51 = sphi 0, %s51
      %s53 = sphi 0, %s51
      %s54 = sphi 0, %s53
      %s68 = sphi 0, %s54
      %s72 = sphi 0, %s72
      %s74 = sphi 0, %s72
      %s75 = sphi 0, %s74
      %s89 = sphi 0, %s75
      %s93 = sphi 0, %s93
      %s95 = sphi 0, %s93
      %s96 = sphi 0, %s95
      %s110 = sphi 0, %s96
      %s116 = sphi 0, %s118
      %s119 = sphi 0, %s116
      %s120 = sphi 0, %s119
      %s136 = sphi 0, %s120
    $region4: #{tpu_custom_call.1} parent=1 // loop_header_branch
      %20 = sbr.rel (%p18) target = $region8
    $region5: #{tpu_custom_call.1} parent=1 // loop_body
      %s22 = ssub.s32 %s17, 1
      %s23 = ssub.s32 %s17, 2
      %s24 = sadd.s32 %s17, 1
      %s25 = ssub.s32 %s17, %s24
      %p26 = scmp.eq.s32.totalorder %s25, 0
      %s28 = sadd.s32 %s27, 1
      %s29 = scalar_select %p26, %s27, %s28
      %p32 = pneg %p26
      %p33 = scmp.eq.s32.totalorder %s17, 1
      %p34 = por %p32, %p33
      %p35 = scmp.ne.s32.totalorder %s27, %s30
      %p36 = scmp.eq.s32.totalorder %s17, 0
      %p37 = por %p35, %p36
      %p38 = scmp.ne.s32.totalorder %s27, %s30
      %p39 = scmp.eq.s32.totalorder %s22, 1
      %p40 = por %p38, %p39
      %p41 = scmp.ne.s32.totalorder %s30, %s31
      %p42 = scmp.eq.s32.totalorder %s22, 0
      %p43 = por %p41, %p42
      %p44 = scmp.ne.s32.totalorder %s30, %s31
      %p45 = scmp.eq.s32.totalorder %s23, 1
      %p46 = por %p44, %p45
      %p48 = scmp.ne.s32.totalorder %s31, %s47
      %p49 = scmp.eq.s32.totalorder %s23, 0
      %p50 = por %p48, %p49
      %s52 = sadd.s32 %s51, 1
      %p55 = scmp.eq.s32.totalorder %s17, 1
      %p56 = scmp.ne.s32.totalorder %s51, %s53
      %p57 = scmp.eq.s32.totalorder %s17, 0
      %p58 = por %p56, %p57
      %p59 = scmp.ne.s32.totalorder %s51, %s53
      %p60 = scmp.eq.s32.totalorder %s22, 1
      %p61 = por %p59, %p60
      %p62 = scmp.ne.s32.totalorder %s53, %s54
      %p63 = scmp.eq.s32.totalorder %s22, 0
      %p64 = por %p62, %p63
      %p65 = scmp.ne.s32.totalorder %s53, %s54
      %p66 = scmp.eq.s32.totalorder %s23, 1
      %p67 = por %p65, %p66
      %p69 = scmp.ne.s32.totalorder %s54, %s68
      %p70 = scmp.eq.s32.totalorder %s23, 0
      %p71 = por %p69, %p70
      %s73 = sadd.s32 %s72, 1
      %p76 = scmp.eq.s32.totalorder %s17, 1
      %p77 = scmp.ne.s32.totalorder %s72, %s74
      %p78 = scmp.eq.s32.totalorder %s17, 0
      %p79 = por %p77, %p78
      %p80 = scmp.ne.s32.totalorder %s72, %s74
      %p81 = scmp.eq.s32.totalorder %s22, 1
      %p82 = por %p80, %p81
      %p83 = scmp.ne.s32.totalorder %s74, %s75
      %p84 = scmp.eq.s32.totalorder %s22, 0
      %p85 = por %p83, %p84
      %p86 = scmp.ne.s32.totalorder %s74, %s75
      %p87 = scmp.eq.s32.totalorder %s23, 1
      %p88 = por %p86, %p87
      %p90 = scmp.ne.s32.totalorder %s75, %s89
      %p91 = scmp.eq.s32.totalorder %s23, 0
      %p92 = por %p90, %p91
      %s94 = sadd.s32 %s93, 1
      %p97 = scmp.eq.s32.totalorder %s17, 1
      %p98 = scmp.ne.s32.totalorder %s93, %s95
      %p99 = scmp.eq.s32.totalorder %s17, 0
      %p100 = por %p98, %p99
      %p101 = scmp.ne.s32.totalorder %s93, %s95
      %p102 = scmp.eq.s32.totalorder %s22, 1
      %p103 = por %p101, %p102
      %p104 = scmp.ne.s32.totalorder %s95, %s96
      %p105 = scmp.eq.s32.totalorder %s22, 0
      %p106 = por %p104, %p105
      %p107 = scmp.ne.s32.totalorder %s95, %s96
      %p108 = scmp.eq.s32.totalorder %s23, 1
      %p109 = por %p107, %p108
      %p111 = scmp.ne.s32.totalorder %s96, %s110
      %p112 = scmp.eq.s32.totalorder %s23, 0
      %p113 = por %p111, %p112
      %s114 = ssub.s32 %s17, %s24
      %p115 = scmp.eq.s32.totalorder %s114, 0
      %s117 = sadd.s32 %s116, 1
      %s118 = scalar_select %p115, %s116, %s117
      %p121 = pneg %p115
      %p122 = scmp.eq.s32.totalorder %s17, 1
      %p123 = por %p121, %p122
      %p124 = scmp.ne.s32.totalorder %s116, %s119
      %p125 = scmp.eq.s32.totalorder %s17, 0
      %p126 = por %p124, %p125
      %p127 = scmp.ne.s32.totalorder %s116, %s119
      %p128 = scmp.eq.s32.totalorder %s22, 1
      %p129 = por %p127, %p128
      %p130 = scmp.ne.s32.totalorder %s119, %s120
      %p131 = scmp.eq.s32.totalorder %s22, 0
      %p132 = por %p130, %p131
      %p133 = scmp.ne.s32.totalorder %s119, %s120
      %p134 = scmp.eq.s32.totalorder %s23, 1
      %p135 = por %p133, %p134
      %p137 = scmp.ne.s32.totalorder %s120, %s136
      %p138 = scmp.eq.s32.totalorder %s23, 0
      %p139 = por %p137, %p138
      %p140 = scmp.le.s32.totalorder 1, %s17
      %p141 = scmp.lt.s32.totalorder %s17, 3
      %p142 = pnand %p140, %p141
      %p143 = pneg %p142
      // Predicated region
      $region9: #{tpu_custom_call.1} parent=5 // pred_check
        _
      $region10: #{tpu_custom_call.1} parent=5 // pred_check_branch
        %145 = sbr.rel (%p142) target = $region12
      $region11: #{tpu_custom_call.1} parent=5 // pred_region
        %s146 = ssub.s32 %s17, 1
        // Predicated region
        $region13: #{tpu_custom_call.1} parent=11 // pred_check
          %p147 = pneg %p64
        $region14: #{tpu_custom_call.1} parent=11 // pred_check_branch
          %149 = sbr.rel (%p147) target = $region16
        $region15: #{tpu_custom_call.1} parent=11 // pred_region
          _
        $region16: #{tpu_custom_call.1} parent=11 // pred_fallthru
          _
        // Predicated region
        $region17: #{tpu_custom_call.1} parent=11 // pred_check
          %p150 = pneg %p85
        $region18: #{tpu_custom_call.1} parent=11 // pred_check_branch
          %152 = sbr.rel (%p150) target = $region20
        $region19: #{tpu_custom_call.1} parent=11 // pred_region
          %s154 = ssub.s32 256, 256
          %155 = vsyncadd [#allocation6], %s154
          %s156 = sshll.u32 [#allocation5], 4
          %s157 = int_to_ptr.vmem [resolvable:$true] %s156
          %162 = dma.hbm_to_vmem [thread:$0]  %s2, 256, %s157, [#allocation6], 128, 128, 8
        $region20: #{tpu_custom_call.1} parent=11 // pred_fallthru
          _
        // Predicated region
        $region21: #{tpu_custom_call.1} parent=11 // pred_check
          %p163 = pneg %p106
        $region22: #{tpu_custom_call.1} parent=11 // pred_check_branch
          %165 = sbr.rel (%p163) target = $region24
        $region23: #{tpu_custom_call.1} parent=11 // pred_region
          _
        $region24: #{tpu_custom_call.1} parent=11 // pred_fallthru
          _
      $region12: #{tpu_custom_call.1} parent=5 // pred_fallthru
        _
      %p166 = scmp.lt.s32.totalorder %s17, 2
      // Predicated region
      $region25: #{tpu_custom_call.1} parent=5 // pred_check
        %p167 = pneg %p166
      $region26: #{tpu_custom_call.1} parent=5 // pred_check_branch
        %169 = sbr.rel (%p167) target = $region28
      $region27: #{tpu_custom_call.1} parent=5 // pred_region
        // Predicated region
        $region29: #{tpu_custom_call.1} parent=27 // pred_check
          %p170 = pneg %p37
        $region30: #{tpu_custom_call.1} parent=27 // pred_check_branch
          %172 = sbr.rel (%p170) target = $region32
        $region31: #{tpu_custom_call.1} parent=27 // pred_region
          %s173 = sand.u32 %s27, 1
          %s174 = scalar_lea.sflag [#allocation3], %s173
          %s175 = sand.u32 %s27, 1
          %s176 = smul.addr %s175, 48
          %s177 = scalar_lea.vmem [#allocation2], %s176
          %s178 = smul.u32 2, %s17
          %s180 = ssub.s32 768, 768
          %181 = vsyncadd %s174, %s180
          %s182 = smul.addr %s178, 128
          %s183 = scalar_lea.hbm %s0, %s182
          %s184 = sshll.u32 %s177, 4
          %s185 = int_to_ptr.vmem [resolvable:$true] %s184
          %190 = dma.hbm_to_vmem [thread:$0]  %s183, 768, %s185, %s174, 512, 256, 16
        $region32: #{tpu_custom_call.1} parent=27 // pred_fallthru
          _
      $region28: #{tpu_custom_call.1} parent=5 // pred_fallthru
        _
      %p191 = scmp.le.s32.totalorder 1, %s17
      %p192 = scmp.lt.s32.totalorder %s17, 3
      %p193 = pnand %p191, %p192
      %p194 = pneg %p193
      // Predicated region
      $region33: #{tpu_custom_call.1} parent=5 // pred_check
        _
      $region34: #{tpu_custom_call.1} parent=5 // pred_check_branch
        %196 = sbr.rel (%p193) target = $region36
      $region35: #{tpu_custom_call.1} parent=5 // pred_region
        %s197 = ssub.s32 %s17, 1
        %s198 = sand.u32 %s30, 1
        %s199 = scalar_lea.sflag [#allocation3], %s198
        %s200 = sand.u32 %s30, 1
        %s201 = smul.addr %s200, 48
        %s202 = scalar_lea.vmem [#allocation2], %s201
        // Predicated region
        $region37: #{tpu_custom_call.1} parent=35 // pred_check
          %p203 = pneg %p43
        $region38: #{tpu_custom_call.1} parent=35 // pred_check_branch
          %205 = sbr.rel (%p203) target = $region40
        $region39: #{tpu_custom_call.1} parent=35 // pred_region
          %206 = dma.done %s199, 768
        $region40: #{tpu_custom_call.1} parent=35 // pred_fallthru
          _
        // Predicated region
        $region41: #{tpu_custom_call.1} parent=35 // pred_check
          %p207 = pneg %p85
        $region42: #{tpu_custom_call.1} parent=35 // pred_check_branch
          %209 = sbr.rel (%p207) target = $region44
        $region43: #{tpu_custom_call.1} parent=35 // pred_region
          %210 = dma.done [#allocation6], 256
        $region44: #{tpu_custom_call.1} parent=35 // pred_fallthru
          _
        %s211 = sand.u32 %s30, 1
        %s212 = scalar_lea.sflag [#allocation3], %s211
        %s213 = sand.u32 %s30, 1
        %s214 = smul.addr %s213, 48
        %s215 = scalar_lea.vmem [#allocation2], %s214
        %p216 = pneg %p43
        %p217 = pneg %p40
        %p218 = pneg %p64
        %p219 = pneg %p61
        %p220 = pneg %p85
        %p221 = pneg %p82
        %p222 = pneg %p106
        %p223 = pneg %p103
        %p224 = pneg %p132
        %p225 = pneg %p129
        %s226 = sand.u32 %s119, 1
        %s227 = scalar_lea.sflag [#allocation4], %s226
        %s228 = sand.u32 %s119, 1
        %s229 = smul.addr %s228, 32
        %s230 = scalar_lea.vmem [#allocation7], %s229
        %s231 = smul.u32 2, %s22
        %s232 = smul.u32 2, %s22
        %v233 = vld [vmem:[%s1] sm:$0xff]
        %v234 = vld [vmem:[%s1 + $0x8] sm:$0xff]
        %v235 = vld [vmem:[%s1 + $0x10] sm:$0xff]
        %v236 = vld [vmem:[%s202] sm:$0xff]
        %v237 = vld [vmem:[%s202 + $0x8] sm:$0xff]
        %v238 = vld [vmem:[%s202 + $0x10] sm:$0xff]
        %v239 = vld [vmem:[%s202 + $0x18] sm:$0xff]
        %v240 = vld [vmem:[%s202 + $0x20] sm:$0x3]
        %v241 = vld [vmem:[%s202 + $0x28] sm:$0x3]
        %v242 = vld [vmem:[%s3] sm:$0xff]
        %v243 = vld [vmem:[%s3 + $0x8] sm:$0xff]
        %v244 = vld [vmem:[%s3 + $0x10] sm:$0xff]
        %246 = vset.pattern.permute.xlu0 0
        %247 = vperm.xlu0 %246, %v242
        %v248 = vpop.permute.xlu0 %247
        %251 = vset.pattern.permute.xlu0 0
        %252 = vperm.xlu0 %251, %v243
        %v253 = vpop.permute.xlu0 %252
        %256 = vset.pattern.permute.xlu0 0
        %257 = vperm.xlu0 %256, %v244
        %v258 = vpop.permute.xlu0 %257
        %vm260 = vcmask 146432
        %v262 = vsel %vm260, %v233, 0
        %v265 = vsel %vm260, %v234, 0
        %v268 = vsel %vm260, %v235, 0
        %vm270 = vcmask 1041408
        %v272 = vsel %vm270, %v240, 0
        %v275 = vsel %vm270, %v241, 0
        %277 = vmatprep.subr.mxu0 0.0
        %278 = vmatpush1.msra.mxu0 0.0
        %279 = vmatprep.subr.mxu0 0.0
        %280 = vmatpush1.msra.mxu0 0.0
        %281 = vmatprep.subr.mxu0 0.0
        %282 = vmatpush1.msra.mxu0 0.0
        %283 = vmatprep.subr.mxu0 0.0
        %284 = vmatpush1.msra.mxu0 0.0
        %285 = vmatprep.subr.mxu0 0.0
        %286 = vmatpush1.msra.mxu0 0.0
        %287 = vmatprep.subr.mxu0 0.0
        %288 = vmatpush1.msra.mxu0 0.0
        %289 = vmatprep.subr.mxu0 0.0
        %290 = vmatpush1.msra.mxu0 0.0
        %291 = vmatprep.subr.mxu0 0.0
        %292 = vmatpush1.msra.mxu0 0.0
        %293 = vmatprep.subr.mxu0 0.0
        %294 = vmatpush1.msra.mxu0 0.0
        %295 = vmatprep.subr.mxu0 0.0
        %296 = vmatpush1.msra.mxu0 0.0
        %297 = vmatprep.subr.mxu0 0.0
        %298 = vmatpush1.msra.mxu0 0.0
        %299 = vmatprep.subr.mxu0 0.0
        %300 = vmatpush1.msra.mxu0 0.0
        %301 = vmatprep.subr.mxu0 0.0
        %302 = vmatpush1.msra.mxu0 0.0
        %303 = vmatprep.subr.mxu0 %v275
        %304 = vmatpush1.msra.mxu0 %v272
        %305 = vmatprep.subr.mxu0 %v239
        %306 = vmatpush1.msra.mxu0 %v238
        %307 = vmatprep.subr.mxu0 %v237
        %308 = vmatpush1.msra.mxu0 %v236
        %309 = vmatprep.subr.mxu0 0.0
        %310 = vmatpush2.msra.mxu0 0.0
        %311 = vmatprep.subr.mxu0 0.0
        %312 = vmatpush2.msra.mxu0 0.0
        %313 = vmatprep.subr.mxu0 0.0
        %314 = vmatpush2.msra.mxu0 0.0
        %315 = vmatprep.subr.mxu0 0.0
        %316 = vmatpush2.msra.mxu0 0.0
        %317 = vmatprep.subr.mxu0 0.0
        %318 = vmatpush2.msra.mxu0 0.0
        %319 = vmatprep.subr.mxu0 0.0
        %320 = vmatpush2.msra.mxu0 0.0
        %321 = vmatprep.subr.mxu0 0.0
        %322 = vmatpush2.msra.mxu0 0.0
        %323 = vmatprep.subr.mxu0 0.0
        %324 = vmatpush2.msra.mxu0 0.0
        %325 = vmatprep.subr.mxu0 0.0
        %326 = vmatpush2.msra.mxu0 0.0
        %327 = vmatprep.subr.mxu0 0.0
        %328 = vmatpush2.msra.mxu0 0.0
        %329 = vmatprep.subr.mxu0 0.0
        %330 = vmatpush2.msra.mxu0 0.0
        %331 = vmatprep.subr.mxu0 0.0
        %332 = vmatpush2.msra.mxu0 0.0
        %333 = vmatprep.subr.mxu0 0.0
        %334 = vmatpush2.msra.mxu0 0.0
        %335 = vmatprep.subr.mxu0 0.0
        %336 = vmatpush2.msra.mxu0 0.0
        %337 = vmatprep.subr.mxu0 0.0
        %338 = vmatpush2.msra.mxu0 0.0
        %339 = vmatprep.subr.mxu0 0.0
        %340 = vmatpush2.msra.mxu0 0.0
        %341 = vmatprep.mubr.f32.mxu0 0.0
        %342 = vmatmul.mubr.f32.gmra.mxu0 %v262
        %v343 = vpop.f32.mrf.mxu0
        %v344 = vadd.f32 %v248, %v343
        %v345 = vpop.f32.mrf.mxu0
        %v346 = vadd.f32 %v248, %v345
        %347 = vmatprep.mubr.f32.mxu0 0.0
        %348 = vmatmul.mubr.f32.gmra.mxu0 %v265
        %v349 = vpop.f32.mrf.mxu0
        %v350 = vadd.f32 %v253, %v349
        %v351 = vpop.f32.mrf.mxu0
        %v352 = vadd.f32 %v253, %v351
        %353 = vmatprep.mubr.f32.mxu0 0.0
        %354 = vmatmul.mubr.f32.gmra.mxu0 %v268
        %v355 = vpop.f32.mrf.mxu0
        %v356 = vadd.f32 %v258, %v355
        %v357 = vpop.f32.mrf.mxu0
        %v358 = vadd.f32 %v258, %v357
        %359 = vdwg.mxu0
        %v360 = vmax.f32 %v344, 0.0
        %v361 = vmax.f32 %v346, 0.0
        %v364 = vrot.slane %v360, 4
        %v365 = vrot.slane %v361, 4
        %366 = vrot.lane.b32.xlu0 %v364, 16
        %v367 = vpop.permute.xlu0 %366
        %368 = vrot.lane.b32.xlu0 %v365, 16
        %v369 = vpop.permute.xlu0 %368
        %vm370 = vcmask 130048
        %v371 = vsel %vm370, %v367, %v369
        %v374 = vsel %vm370, 0.0, %v367
        %375 = vrot.lane.b32.xlu0 %v360, 112
        %v376 = vpop.permute.xlu0 %375
        %377 = vrot.lane.b32.xlu0 %v361, 112
        %v378 = vpop.permute.xlu0 %377
        %vm379 = vcmask 916480
        %v380 = vsel %vm379, %v376, %v378
        %v382 = vsel %vm379, %v378, 0.0
        %v384 = vrot.slane %v380, 4
        %v385 = vrot.slane %v382, 4
        %vm386 = vcmask 1043456
        %v387 = vsel %vm386, %v374, %v360
        %v388 = vsel %vm386, %v371, %v361
        %v389 = vld [vmem:[#allocation5] sm:$0xff]
        %vm390 = vcmask 97280
        %v392 = vsel %vm390, %v389, 0
        %v394 = vsel %vm386, %v384, 0
        %v396 = vsel %vm386, %v385, 0
        %398 = vmatprep.subr.mxu0 0.0
        %399 = vmatpush1.msra.mxu0 0.0
        %400 = vmatprep.subr.mxu0 0.0
        %401 = vmatpush1.msra.mxu0 0.0
        %402 = vmatprep.subr.mxu0 0.0
        %403 = vmatpush1.msra.mxu0 0.0
        %404 = vmatprep.subr.mxu0 0.0
        %405 = vmatpush1.msra.mxu0 0.0
        %406 = vmatprep.subr.mxu0 0.0
        %407 = vmatpush1.msra.mxu0 0.0
        %408 = vmatprep.subr.mxu0 0.0
        %409 = vmatpush1.msra.mxu0 0.0
        %410 = vmatprep.subr.mxu0 0.0
        %411 = vmatpush1.msra.mxu0 0.0
        %412 = vmatprep.subr.mxu0 0.0
        %413 = vmatpush1.msra.mxu0 0.0
        %414 = vmatprep.subr.mxu0 0.0
        %415 = vmatpush1.msra.mxu0 0.0
        %416 = vmatprep.subr.mxu0 0.0
        %417 = vmatpush1.msra.mxu0 0.0
        %418 = vmatprep.subr.mxu0 0.0
        %419 = vmatpush1.msra.mxu0 0.0
        %420 = vmatprep.subr.mxu0 0.0
        %421 = vmatpush1.msra.mxu0 0.0
        %422 = vmatprep.subr.mxu0 0.0
        %423 = vmatpush1.msra.mxu0 0.0
        %424 = vmatprep.subr.mxu0 0.0
        %425 = vmatpush1.msra.mxu0 0.0
        %426 = vmatprep.subr.mxu0 %v396
        %427 = vmatpush1.msra.mxu0 %v394
        %428 = vmatprep.subr.mxu0 %v388
        %429 = vmatpush1.msra.mxu0 %v387
        %430 = vmatprep.subr.mxu0 0.0
        %431 = vmatpush2.msra.mxu0 0.0
        %432 = vmatprep.subr.mxu0 0.0
        %433 = vmatpush2.msra.mxu0 0.0
        %434 = vmatprep.subr.mxu0 0.0
        %435 = vmatpush2.msra.mxu0 0.0
        %436 = vmatprep.subr.mxu0 0.0
        %437 = vmatpush2.msra.mxu0 0.0
        %438 = vmatprep.subr.mxu0 0.0
        %439 = vmatpush2.msra.mxu0 0.0
        %440 = vmatprep.subr.mxu0 0.0
        %441 = vmatpush2.msra.mxu0 0.0
        %442 = vmatprep.subr.mxu0 0.0
        %443 = vmatpush2.msra.mxu0 0.0
        %444 = vmatprep.subr.mxu0 0.0
        %445 = vmatpush2.msra.mxu0 0.0
        %446 = vmatprep.subr.mxu0 0.0
        %447 = vmatpush2.msra.mxu0 0.0
        %448 = vmatprep.subr.mxu0 0.0
        %449 = vmatpush2.msra.mxu0 0.0
        %450 = vmatprep.subr.mxu0 0.0
        %451 = vmatpush2.msra.mxu0 0.0
        %452 = vmatprep.subr.mxu0 0.0
        %453 = vmatpush2.msra.mxu0 0.0
        %454 = vmatprep.subr.mxu0 0.0
        %455 = vmatpush2.msra.mxu0 0.0
        %456 = vmatprep.subr.mxu0 0.0
        %457 = vmatpush2.msra.mxu0 0.0
        %458 = vmatprep.subr.mxu0 0.0
        %459 = vmatpush2.msra.mxu0 0.0
        %460 = vmatprep.subr.mxu0 0.0
        %461 = vmatpush2.msra.mxu0 0.0
        %462 = vmatprep.mubr.f32.mxu0 0.0
        %463 = vmatmul.mubr.f32.gmra.mxu0 %v392
        %v464 = vpop.f32.mrf.mxu0
        %v465 = vadd.f32 0.0, %v464
        %v466 = vpop.f32.mrf.mxu0
        %v467 = vadd.f32 0.0, %v466
        %468 = vdwg.mxu0
        %v469 = vadd.f32 %v350, %v465
        %v470 = vadd.f32 %v352, %v467
        %v471 = vmax.f32 %v469, 0.0
        %v472 = vmax.f32 %v470, 0.0
        %v475 = vrot.slane %v471, 4
        %v476 = vrot.slane %v472, 4
        %477 = vrot.lane.b32.xlu0 %v475, 16
        %v478 = vpop.permute.xlu0 %477
        %479 = vrot.lane.b32.xlu0 %v476, 16
        %v480 = vpop.permute.xlu0 %479
        %v481 = vsel %vm370, %v478, %v480
        %v484 = vsel %vm370, 0.0, %v478
        %485 = vrot.lane.b32.xlu0 %v471, 112
        %v486 = vpop.permute.xlu0 %485
        %487 = vrot.lane.b32.xlu0 %v472, 112
        %v488 = vpop.permute.xlu0 %487
        %v489 = vsel %vm379, %v486, %v488
        %v491 = vsel %vm379, %v488, 0.0
        %v493 = vrot.slane %v489, 4
        %v494 = vrot.slane %v491, 4
        %v495 = vsel %vm386, %v484, %v471
        %v496 = vsel %vm386, %v481, %v472
        %s497 = scalar_lea.vmem [#allocation5], 8
        %v498 = vld [vmem:[%s497] sm:$0xff]
        %v500 = vsel %vm390, %v498, 0
        %v502 = vsel %vm386, %v493, 0
        %v504 = vsel %vm386, %v494, 0
        %506 = vmatprep.subr.mxu0 0.0
        %507 = vmatpush1.msra.mxu0 0.0
        %508 = vmatprep.subr.mxu0 0.0
        %509 = vmatpush1.msra.mxu0 0.0
        %510 = vmatprep.subr.mxu0 0.0
        %511 = vmatpush1.msra.mxu0 0.0
        %512 = vmatprep.subr.mxu0 0.0
        %513 = vmatpush1.msra.mxu0 0.0
        %514 = vmatprep.subr.mxu0 0.0
        %515 = vmatpush1.msra.mxu0 0.0
        %516 = vmatprep.subr.mxu0 0.0
        %517 = vmatpush1.msra.mxu0 0.0
        %518 = vmatprep.subr.mxu0 0.0
        %519 = vmatpush1.msra.mxu0 0.0
        %520 = vmatprep.subr.mxu0 0.0
        %521 = vmatpush1.msra.mxu0 0.0
        %522 = vmatprep.subr.mxu0 0.0
        %523 = vmatpush1.msra.mxu0 0.0
        %524 = vmatprep.subr.mxu0 0.0
        %525 = vmatpush1.msra.mxu0 0.0
        %526 = vmatprep.subr.mxu0 0.0
        %527 = vmatpush1.msra.mxu0 0.0
        %528 = vmatprep.subr.mxu0 0.0
        %529 = vmatpush1.msra.mxu0 0.0
        %530 = vmatprep.subr.mxu0 0.0
        %531 = vmatpush1.msra.mxu0 0.0
        %532 = vmatprep.subr.mxu0 0.0
        %533 = vmatpush1.msra.mxu0 0.0
        %534 = vmatprep.subr.mxu0 %v504
        %535 = vmatpush1.msra.mxu0 %v502
        %536 = vmatprep.subr.mxu0 %v496
        %537 = vmatpush1.msra.mxu0 %v495
        %538 = vmatprep.subr.mxu0 0.0
        %539 = vmatpush2.msra.mxu0 0.0
        %540 = vmatprep.subr.mxu0 0.0
        %541 = vmatpush2.msra.mxu0 0.0
        %542 = vmatprep.subr.mxu0 0.0
        %543 = vmatpush2.msra.mxu0 0.0
        %544 = vmatprep.subr.mxu0 0.0
        %545 = vmatpush2.msra.mxu0 0.0
        %546 = vmatprep.subr.mxu0 0.0
        %547 = vmatpush2.msra.mxu0 0.0
        %548 = vmatprep.subr.mxu0 0.0
        %549 = vmatpush2.msra.mxu0 0.0
        %550 = vmatprep.subr.mxu0 0.0
        %551 = vmatpush2.msra.mxu0 0.0
        %552 = vmatprep.subr.mxu0 0.0
        %553 = vmatpush2.msra.mxu0 0.0
        %554 = vmatprep.subr.mxu0 0.0
        %555 = vmatpush2.msra.mxu0 0.0
        %556 = vmatprep.subr.mxu0 0.0
        %557 = vmatpush2.msra.mxu0 0.0
        %558 = vmatprep.subr.mxu0 0.0
        %559 = vmatpush2.msra.mxu0 0.0
        %560 = vmatprep.subr.mxu0 0.0
        %561 = vmatpush2.msra.mxu0 0.0
        %562 = vmatprep.subr.mxu0 0.0
        %563 = vmatpush2.msra.mxu0 0.0
        %564 = vmatprep.subr.mxu0 0.0
        %565 = vmatpush2.msra.mxu0 0.0
        %566 = vmatprep.subr.mxu0 0.0
        %567 = vmatpush2.msra.mxu0 0.0
        %568 = vmatprep.subr.mxu0 0.0
        %569 = vmatpush2.msra.mxu0 0.0
        %570 = vmatprep.mubr.f32.mxu0 0.0
        %571 = vmatmul.mubr.f32.gmra.mxu0 %v500
        %v572 = vpop.f32.mrf.mxu0
        %v573 = vadd.f32 0.0, %v572
        %v574 = vpop.f32.mrf.mxu0
        %v575 = vadd.f32 0.0, %v574
        %576 = vdwg.mxu0
        %v577 = vadd.f32 %v356, %v573
        %v578 = vadd.f32 %v358, %v575
        %v579 = vmax.f32 %v577, 0.0
        %v580 = vmax.f32 %v578, 0.0
        %v583 = vsel %vm386, %v360, %v475
        %v584 = vsel %vm386, %v361, %v476
        %585 = vst [vmem:[%s230] sm:$0xff] %v583
        %586 = vst [vmem:[%s230 + $0x8] sm:$0xff] %v584
        %587 = vst [vmem:[%s230 + $0x10] sm:$0xff] %v579
        %588 = vst [vmem:[%s230 + $0x18] sm:$0xff] %v580
        %s589 = sand.u32 %s119, 1
        %s590 = scalar_lea.sflag [#allocation4], %s589
        %s591 = sand.u32 %s119, 1
        %s592 = smul.addr %s591, 32
        %s593 = scalar_lea.vmem [#allocation7], %s592
        // Predicated region
        $region45: #{tpu_custom_call.1} parent=35 // pred_check
          %p594 = pneg %p129
        $region46: #{tpu_custom_call.1} parent=35 // pred_check_branch
          %596 = sbr.rel (%p594) target = $region48
        $region47: #{tpu_custom_call.1} parent=35 // pred_region
          %s597 = smul.u32 2, %s22
          %s599 = ssub.s32 512, 512
          %600 = vsyncadd %s590, %s599
          %s601 = smul.addr %s597, 128
          %s602 = scalar_lea.hbm %s4, %s601
          %s603 = sshll.u32 %s593, 4
          %s604 = int_to_ptr.vmem [resolvable:$true] %s603
          %609 = dma.vmem_to_hbm [thread:$0]  %s604, 512, %s602, %s590, 256, 512, 16
        $region48: #{tpu_custom_call.1} parent=35 // pred_fallthru
          _
      $region36: #{tpu_custom_call.1} parent=5 // pred_fallthru
        _
      %p610 = scmp.le.s32.totalorder 2, %s17
      // Predicated region
      $region49: #{tpu_custom_call.1} parent=5 // pred_check
        %p611 = pneg %p610
      $region50: #{tpu_custom_call.1} parent=5 // pred_check_branch
        %613 = sbr.rel (%p611) target = $region52
      $region51: #{tpu_custom_call.1} parent=5 // pred_region
        %s614 = ssub.s32 %s17, 2
        // Predicated region
        $region53: #{tpu_custom_call.1} parent=51 // pred_check
          %p615 = pneg %p135
        $region54: #{tpu_custom_call.1} parent=51 // pred_check_branch
          %617 = sbr.rel (%p615) target = $region56
        $region55: #{tpu_custom_call.1} parent=51 // pred_region
          %s618 = sand.u32 %s120, 1
          %s619 = scalar_lea.sflag [#allocation4], %s618
          %s620 = sand.u32 %s120, 1
          %s621 = smul.addr %s620, 32
          %s622 = scalar_lea.vmem [#allocation7], %s621
          %623 = dma.done %s619, 512
        $region56: #{tpu_custom_call.1} parent=51 // pred_fallthru
          _
      $region52: #{tpu_custom_call.1} parent=5 // pred_fallthru
        _
    $region6: #{tpu_custom_call.1} parent=1 // loop_footer
      %s21 = sadd.s32 1, %s17
    $region7: #{tpu_custom_call.1} parent=1 // loop_footer_branch
      %16 = sbr.rel target = $region3
    $region8: #{tpu_custom_call.1} parent=1 // loop_exit
      _
    %624 = vsyncpa [#allocation3], 1
    %s625 = scalar_lea.sflag [#allocation3], 1
    %626 = vsyncpa %s625, 1
    %627 = vsyncpa [#allocation6], 1
    %628 = vsyncpa [#allocation4], 1
    %s629 = scalar_lea.sflag [#allocation4], 1
    %630 = vsyncpa %s629, 1

</llo_original>
